<compile_context>
chip_gen: v6e
topology: v6e:2x2x1
jax: 0.10.0
libtpu: 0.0.40
codegen_flags: <defaults>
</compile_context>

<pallas_src>
import jax
import jax.numpy as jnp
from jax.experimental import pallas as pl
from jax.experimental.pallas import tpu as pltpu


# ---------------- Pallas kernel (backward only) ----------------

def _neg_scale_kernel(alpha_ref, g_ref, o_ref):
    # alpha_ref: (1,) f32 scalar in SMEM; g_ref/o_ref: (block_rows, lane) tile.
    scale = (-alpha_ref[0]).astype(jnp.float32)
    o_ref[...] = (g_ref[...].astype(jnp.float32) * scale).astype(o_ref.dtype)


def _grl_bwd_pallas(alpha, g):
    """Compute -alpha * g with a tiled, lane-dense Pallas kernel."""
    orig_shape = g.shape
    orig_dtype = g.dtype
    n = g.size
    flat = g.reshape(-1)

    # Pick a lane-dense last dim: largest of {1024,512,256,128} dividing numel.
    lane = None
    for cand in (1024, 512, 256, 128):
        if n % cand == 0:
            lane = cand
            break
    pad = 0
    if lane is None:
        # General fallback: pad to a multiple of 128 lanes, slice back after.
        lane = 128
        pad = (-n) % lane
        flat = jnp.pad(flat, (0, pad))

    rows = flat.size // lane
    g2d = flat.reshape(rows, lane)

    # Tile rows: keep per-buffer tile ~2 MiB (f32) so double-buffered in+out
    # stays well under v7x's 32 MiB scoped / 64 MiB physical VMEM.
    max_block_elems = 512 * 1024
    cap = max(8, max_block_elems // lane)
    if rows <= cap:
        block_rows = rows            # full extent (always legal)
    else:
        block_rows = (cap // 8) * 8  # multiple of 8 sublanes when tiling

    grid = (pl.cdiv(rows, block_rows),)

    alpha_arr = jnp.asarray([alpha], dtype=jnp.float32)

    dx2d = pl.pallas_call(
        _neg_scale_kernel,
        out_shape=jax.ShapeDtypeStruct((rows, lane), orig_dtype),
        grid=grid,
        in_specs=[
            pl.BlockSpec(memory_space=pltpu.MemorySpace.SMEM),   # alpha scalar
            pl.BlockSpec((block_rows, lane), lambda i: (i, 0)),  # grad tile
        ],
        out_specs=pl.BlockSpec((block_rows, lane), lambda i: (i, 0)),
        input_output_aliases={1: 0},  # dx overwrites the grad buffer
        compiler_params=pltpu.CompilerParams(
            dimension_semantics=("parallel",)),
    )(alpha_arr, g2d)

    dx = dx2d.reshape(-1)
    if pad:
        dx = dx[:n]
    return dx.reshape(orig_shape)


# ---------------- GRL with custom VJP ----------------

def make_grl(alpha: float):
    @jax.custom_vjp
    def grl(x):
        # Forward is identity (view_as in PyTorch) — no kernel, no copy.
        return x

    def grl_fwd(x):
        return x, None

    def grl_bwd(_, g):
        return (_grl_bwd_pallas(alpha, g),)

    grl.defvjp(grl_fwd, grl_bwd)
    return grl


class GRL:
    """JAX/Pallas equivalent of the PyTorch GRL module (no parameters)."""

    def __init__(self, alpha: float):
        self.alpha = alpha
        self._fn = make_grl(alpha)

    def __call__(self, x):
        return self._fn(x)


# ---------------- main ----------------

if __name__ == "__main__":
    key = jax.random.PRNGKey(0)
    # Small NCHW input consistent with a typical conv-style tensor.
    x = jax.random.normal(key, (2, 4, 16, 16), dtype=jnp.float32)

    alpha = 0.5
    grl = GRL(alpha)

    # Forward: identity.
    y = grl(x)
    y = jax.block_until_ready(y)
    assert y.shape == x.shape and y.dtype == x.dtype
    assert jnp.allclose(y, x)

    # Backward (runs the Pallas kernel): grad of sum(grl(x)) is -alpha * ones.
    gx = jax.grad(lambda a: jnp.sum(grl(a)))(x)
    gx = jax.block_until_ready(gx)
    assert gx.shape == x.shape and gx.dtype == x.dtype
    assert jnp.allclose(gx, -alpha * jnp.ones_like(x))

    print("KERNEL_OK")
</pallas_src>

<mosaic_0001>
module attributes {stable_mosaic.version = 11 : i64} {
  func.func @_neg_scale_kernel(%arg0: i32, %arg1: memref<1xf32, #tpu.memory_space<smem>>, %arg2: memref<2x1024xf32, #tpu.memory_space<vmem>>, %arg3: memref<2x1024xf32, #tpu.memory_space<vmem>>) attributes {dimension_semantics = [#tpu.dimension_semantics<parallel>], iteration_bounds = array<i64: 1>, scalar_prefetch = 0 : i64, scratch_operands = 0 : i64, tpu.core_type = #tpu.core_type<tc>, window_params = [{transform_indices = @transform_0, window_bounds = array<i64: 1>}, {transform_indices = @transform_1, window_bounds = array<i64: 2, 1024>}, {transform_indices = @transform_2, window_bounds = array<i64: 2, 1024>}]} {
    %c0 = arith.constant 0 : index
    %0 = memref.load %arg1[%c0] : memref<1xf32, #tpu.memory_space<smem>>
    %cst = arith.constant 0.000000e+00 : f32
    %1 = arith.subf %cst, %0 : f32
    %c0_0 = arith.constant 0 : index
    %c0_1 = arith.constant 0 : index
    %2 = vector.load %arg2[%c0_0, %c0_1] : memref<2x1024xf32, #tpu.memory_space<vmem>>, vector<2x1024xf32>
    %3 = vector.broadcast %1 : f32 to vector<2x1024xf32>
    %4 = arith.mulf %2, %3 : vector<2x1024xf32>
    %c0_2 = arith.constant 0 : index
    %c0_3 = arith.constant 0 : index
    %5 = vector.load %arg3[%c0_2, %c0_3] : memref<2x1024xf32, #tpu.memory_space<vmem>>, vector<2x1024xf32>
    tpu.vector_store %arg3[%c0_2, %c0_3], %4 {strides = array<i32>} : memref<2x1024xf32, #tpu.memory_space<vmem>>, vector<2x1024xf32>,
    return
  }
  func.func @transform_0(%arg0: i32) -> i32 {
    %c0_i32 = arith.constant 0 : i32
    %c0_i32_0 = arith.constant 0 : i32
    return %c0_i32 : i32
  }
  func.func @transform_1(%arg0: i32) -> (i32, i32) {
    %c0_i32 = arith.constant 0 : i32
    %c0_i32_0 = arith.constant 0 : i32
    return %arg0, %c0_i32 : i32, i32
  }
  func.func @transform_2(%arg0: i32) -> (i32, i32) {
    %c0_i32 = arith.constant 0 : i32
    %c0_i32_0 = arith.constant 0 : i32
    return %arg0, %c0_i32 : i32, i32
  }
}

</mosaic_0001>

<llo_original>
// kernel: tpu_custom_call.1
$region0: #{tpu_custom_call.1}
  #allocation0 [shape = 'u32[]', space=smem, size = 0x4, offset = 0x4, fixed_abs, tag = 'smem constant byte address 0x4 - core index']
  #allocation1 [shape = 'u32[144,128]{1,0:T(1,128)}', space=vmem, size = 0x12000, scoped, tag = 'internal scratch']
  #allocation2 [shape = 'f32[1]{0:T(128)S(6)}', space=smem, size = 0x200, scoped, tag = 'scoped memory for tpu_custom_call.1']
  %s0 = inlined_call_operand.<no memory space> [shape: f32[1], index: 0, kind: input, shape index: {}]
  %s1 = inlined_call_operand.hbm [shape: f32[2,1024], index: 1, kind: input, shape index: {}, may-alias: {1,2}]
  %s2 = inlined_call_operand.hbm [shape: f32[2,1024], index: 2, kind: output, shape index: {}, may-alias: {1,2}]
  %s3 = sld [smem:[#allocation0]]
  $region22: #{tpu_custom_call.1} parent=0
    _
  %s5 = ssub.s32 1, %s3
  %s6 = scalar_select 0, %s5, %s3
  %7 = sst [smem:[#allocation2]] %s0
  $region1: #{tpu_custom_call.1} parent=0
    #allocation3 [shape = 'u8[8192]{0}', space=vmem, size = 0x2000, scoped, tag = 'input window, operand 1, single buffered']
    #allocation4 [shape = 's32[1]{0}', space=sflag, size = 0x4, scoped, tag = 'scoped memory for tpu_custom_call.1']
    #allocation5 [shape = 's32[1]{0}', space=sflag, size = 0x4, scoped, tag = 'scoped memory for tpu_custom_call.1']
    #allocation6 [shape = 'u8[8192]{0}', space=vmem, size = 0x2000, scoped, tag = 'output window, operand 0, single buffered']
    %8 = vsyncpa [#allocation4], 0
    %9 = vsyncpa [#allocation5], 0
    // Predicated region
    $region2: #{tpu_custom_call.1} parent=1 // pred_check
      _
    $region3: #{tpu_custom_call.1} parent=1 // pred_check_branch
      %11 = sbr.rel (0) target = $region5
    $region4: #{tpu_custom_call.1} parent=1 // pred_region
      _
    $region5: #{tpu_custom_call.1} parent=1 // pred_fallthru
      _
    // Predicated region
    $region6: #{tpu_custom_call.1} parent=1 // pred_check
      _
    $region7: #{tpu_custom_call.1} parent=1 // pred_check_branch
      %13 = sbr.rel (0) target = $region9
    $region8: #{tpu_custom_call.1} parent=1 // pred_region
      %s15 = ssub.s32 256, 256
      %16 = vsyncadd [#allocation4], %s15
      %s18 = sshll.u32 [#allocation3], 4
      %s19 = int_to_ptr.vmem [resolvable:$true] %s18
      %21 = dma.hbm_to_vmem [thread:$0]  %s1, 256, %s19, [#allocation4]
    $region9: #{tpu_custom_call.1} parent=1 // pred_fallthru
      _
    // Predicated region
    $region10: #{tpu_custom_call.1} parent=1 // pred_check
      _
    $region11: #{tpu_custom_call.1} parent=1 // pred_check_branch
      %23 = sbr.rel (0) target = $region13
    $region12: #{tpu_custom_call.1} parent=1 // pred_region
      %24 = dma.done [#allocation4], 256
    $region13: #{tpu_custom_call.1} parent=1 // pred_fallthru
      _
    %s25 = sld [smem:[#allocation2]]
    %s26 = ssub.f32 0.0, %s25
    %v27 = vld [vmem:[#allocation3] sm:$0xff]
    %v28 = vld [vmem:[#allocation3 + $0x8] sm:$0xff]
    %v29 = vstv %s26
    %v30 = vmul.f32 %v27, %v29
    %v31 = vmul.f32 %v28, %v29
    %32 = vst [vmem:[#allocation6] sm:$0xff] %v30
    %33 = vst [vmem:[#allocation6 + $0x8] sm:$0xff] %v31
    // Predicated region
    $region14: #{tpu_custom_call.1} parent=1 // pred_check
      _
    $region15: #{tpu_custom_call.1} parent=1 // pred_check_branch
      %35 = sbr.rel (0) target = $region17
    $region16: #{tpu_custom_call.1} parent=1 // pred_region
      %s37 = ssub.s32 256, 256
      %38 = vsyncadd [#allocation5], %s37
      %s40 = sshll.u32 [#allocation6], 4
      %s41 = int_to_ptr.vmem [resolvable:$true] %s40
      %43 = dma.vmem_to_hbm [thread:$0]  %s41, 256, %s2, [#allocation5]
    $region17: #{tpu_custom_call.1} parent=1 // pred_fallthru
      _
    // Predicated region
    $region18: #{tpu_custom_call.1} parent=1 // pred_check
      _
    $region19: #{tpu_custom_call.1} parent=1 // pred_check_branch
      %45 = sbr.rel (0) target = $region21
    $region20: #{tpu_custom_call.1} parent=1 // pred_region
      %46 = dma.done [#allocation5], 256
    $region21: #{tpu_custom_call.1} parent=1 // pred_fallthru
      _
    %47 = vsyncpa [#allocation4], 1
    %48 = vsyncpa [#allocation5], 1

</llo_original>
